<compile_context>
chip_gen: v7x
topology: tpu7x:2x2x1
jax: 0.10.0
libtpu: 0.0.40
codegen_flags: <defaults>
</compile_context>

<pallas_src>
import functools

import jax
import jax.numpy as jnp
from jax.experimental import pallas as pl
from jax.experimental.pallas import tpu as pltpu


_BLOCK_TARGET_BYTES = 4 * 1024 * 1024     # ~4 MiB of logits DMA'd per grid step
_VMEM_BUDGET_BYTES = 24 * 1024 * 1024     # double-buffered working-set cap (v7x-safe)
_VMEM_LIMIT_BYTES = 48 * 1024 * 1024      # scoped-VMEM ceiling handed to Mosaic
_NUM_CORE_SPLITS = 2                      # leading "parallel" grid axis (v7x megacore)
_MIN_PALLAS_ROWS = 256                    # below this, plain JAX beats a kernel launch


def _round_up(x, m):
    return ((x + m - 1) // m) * m


def _pick_tn(n_rows, d, pred_itemsize):
    """Rows per grid step (lane axis): multiple of 128, sized by HBM bytes + VMEM."""
    tn = _BLOCK_TARGET_BYTES // (d * pred_itemsize)
    # VMEM per lane: 2 buffers x (pred tile sublane-padded to 8 + int32 label tile
    # sublane-padded to 8).  The (1, 128) outputs per core-split are negligible.
    per_lane = 2 * (_round_up(d, 8) * pred_itemsize + 8 * 4)
    tn = min(tn, _VMEM_BUDGET_BYTES // per_lane)
    tn = max(128, (tn // 128) * 128)
    return n_rows if n_rows <= tn else tn


def _ce_sum_kernel(pred_ref, lbl_ref, sum_ref, cnt_ref, *, n_valid, inner_blocks):
    """One grid step: masked-CE partial sum + masked-row count for one lane tile.

    Layout: classes on sublanes (axis 0), rows on the 128-wide lane axis (axis 1).
      pred_ref : VMEM (d, TN)   logits (any float dtype; upcast here)
      lbl_ref  : VMEM (1, TN)   int32 target class, or -1 for masked-out rows
      sum_ref  : VMEM (1, 128)  this core-split's CE partial sum (broadcast on lanes)
      cnt_ref  : VMEM (1, 128)  this core-split's masked-row count (broadcast on lanes)
    """
    c = pl.program_id(0)            # core-split (parallel axis)
    i = pl.program_id(1)            # block within this split (arbitrary axis)
    d, tn = pred_ref.shape

    @pl.when(i == 0)
    def _():
        sum_ref[...] = jnp.zeros_like(sum_ref)
        cnt_ref[...] = jnp.zeros_like(cnt_ref)

    p = pred_ref[...].astype(jnp.float32)                     # (d, TN)
    lbl = lbl_ref[...]                                        # (1, TN) int32

    # Validity: real (non-overhang, non-duplicated) column AND row not masked out.
    col = (c * inner_blocks + i) * tn + jax.lax.broadcasted_iota(jnp.int32, (1, tn), 1)
    mask = jnp.logical_and(col < n_valid, lbl >= 0)           # (1, TN) bool

    # One-hot gather of the target logit (classes live on a <=8-sublane axis: cheap).
    cls = jax.lax.broadcasted_iota(jnp.int32, (d, tn), 0)
    sel = jnp.sum(p * (cls == lbl).astype(jnp.float32), axis=0, keepdims=True)

    # Stable logsumexp over classes (sublane axis).
    pm = jnp.max(p, axis=0, keepdims=True)
    lse = pm + jnp.log(jnp.sum(jnp.exp(p - pm), axis=0, keepdims=True))
    ce = lse - sel                                            # (1, TN)

    # jnp.where (select, not multiply) so garbage in the ragged overhang can't NaN.
    sum_ref[...] += jnp.sum(jnp.where(mask, ce, 0.0), axis=1, keepdims=True)
    cnt_ref[...] += jnp.sum(jnp.where(mask, 1.0, 0.0), axis=1, keepdims=True)


def masked_ce_sums_lane_dense(pred_cd, labels, *, tn=None):
    """pred_cd: (d, N) lane-dense logits. labels: (N,) int32 target class, or -1
    for masked-out rows.  Returns (sum of CE over unmasked rows, unmasked count)."""
    d, n = pred_cd.shape
    lbl = labels.reshape(1, n).astype(jnp.int32)
    if tn is None:
        tn = _pick_tn(n, d, jnp.dtype(pred_cd.dtype).itemsize)
    nblocks = pl.cdiv(n, tn)
    splits = min(_NUM_CORE_SPLITS, nblocks)
    inner = pl.cdiv(nblocks, splits)

    def blk(c, i):
        # Clamp so the uneven last core-split never asks for an out-of-range block;
        # the logical-column check inside the kernel masks those repeats to zero.
        return (0, jnp.minimum(c * inner + i, nblocks - 1))

    kernel = functools.partial(_ce_sum_kernel, n_valid=n, inner_blocks=inner)
    sums, cnts = pl.pallas_call(
        kernel,
        out_shape=(jax.ShapeDtypeStruct((1, 128 * splits), jnp.float32),
                   jax.ShapeDtypeStruct((1, 128 * splits), jnp.float32)),
        grid=(splits, inner),
        in_specs=[pl.BlockSpec((d, tn), blk),
                  pl.BlockSpec((1, tn), blk)],
        out_specs=(pl.BlockSpec((1, 128), lambda c, i: (0, c)),
                   pl.BlockSpec((1, 128), lambda c, i: (0, c))),
        compiler_params=pltpu.CompilerParams(
            dimension_semantics=("parallel", "arbitrary"),
            vmem_limit_bytes=_VMEM_LIMIT_BYTES),
    )(pred_cd, lbl)
    # Every lane of a core-split's (1, 128) block holds the same partial; combine.
    sum_ce = jnp.sum(sums.reshape(splits, 128)[:, 0])
    cnt = jnp.sum(cnts.reshape(splits, 128)[:, 0])
    return sum_ce, cnt


def _masked_ce_jax(pred, true):
    """Plain-JAX masked CE sums for tiny row counts (launch cost > math)."""
    p = pred.astype(jnp.float32)
    t = true.astype(jnp.float32)
    mask = jnp.any(t != 0.0, axis=-1)
    tgt = jnp.argmax(t, axis=-1)
    lse = jax.nn.logsumexp(p, axis=-1)
    sel = jnp.take_along_axis(p, tgt[:, None], axis=-1)[:, 0]
    ce = lse - sel
    return jnp.sum(jnp.where(mask, ce, 0.0)), jnp.sum(mask.astype(jnp.float32))


def _masked_ce_sums(pred, true, *, tn=None, min_pallas_rows=_MIN_PALLAS_ROWS):
    """pred, true: (n_rows, d) natural layout. Returns (masked CE sum, masked count)."""
    n, d = pred.shape
    if n < min_pallas_rows:
        return _masked_ce_jax(pred, true)
    # Single fused pass over `true`: target class, or -1 where the row is all zero.
    labels = jnp.where(jnp.any(true != 0.0, axis=-1),
                       jnp.argmax(true, axis=-1), -1).astype(jnp.int32)
    # TODO(synk): have the producer emit (d, N) lane-dense logits directly; this
    # transpose is a materialized XLA copy and is the remaining HBM overhead.
    return masked_ce_sums_lane_dense(pred.T, labels, tn=tn)


def _ce_mean_all_rows(pred, true):
    """Plain-JAX mean CE with argmax targets (used for the tiny y loss)."""
    p = pred.astype(jnp.float32)
    tgt = jnp.argmax(true, axis=-1)
    lse = jax.nn.logsumexp(p, axis=-1)
    sel = jnp.take_along_axis(p, tgt[:, None], axis=-1)[:, 0]
    return jnp.mean(lse - sel)


def train_loss_discrete(masked_pred_X, masked_pred_E, pred_y,
                        true_X, true_E, true_y, lambda_train,
                        *, min_pallas_rows=_MIN_PALLAS_ROWS):
    """Pallas implementation of TrainLossDiscrete.forward (log=False path)."""
    dx = true_X.shape[-1]
    de = true_E.shape[-1]
    dy = true_y.shape[-1]

    sX, cX = _masked_ce_sums(masked_pred_X.reshape(-1, dx), true_X.reshape(-1, dx),
                             min_pallas_rows=min_pallas_rows)
    sE, cE = _masked_ce_sums(masked_pred_E.reshape(-1, de), true_E.reshape(-1, de),
                             min_pallas_rows=min_pallas_rows)

    # Documented deviation: 0 instead of NaN when no unmasked rows exist.
    loss_X = jnp.where(cX > 0, sX / jnp.maximum(cX, 1.0), 0.0)
    loss_E = jnp.where(cE > 0, sE / jnp.maximum(cE, 1.0), 0.0)

    loss_y = _ce_mean_all_rows(pred_y.reshape(-1, dy), true_y.reshape(-1, dy))

    return loss_X + lambda_train[0] * loss_E + lambda_train[1] * loss_y


# ---------------------------------------------------------------------------
# pure-JAX reference (mirrors the PyTorch semantics) for verification
# ---------------------------------------------------------------------------
def _ref_ce(pred, true, apply_mask):
    tgt = jnp.argmax(true, axis=-1)
    lse = jax.nn.logsumexp(pred, axis=-1)
    sel = jnp.take_along_axis(pred, tgt[:, None], axis=1)[:, 0]
    ce = lse - sel
    if apply_mask:
        m = jnp.any(true != 0.0, axis=-1)
        return jnp.sum(jnp.where(m, ce, 0.0)) / jnp.sum(m)
    return jnp.mean(ce)


def _ref_loss(masked_pred_X, masked_pred_E, pred_y,
              true_X, true_E, true_y, lambda_train):
    dx, de, dy = true_X.shape[-1], true_E.shape[-1], true_y.shape[-1]
    lX = _ref_ce(masked_pred_X.reshape(-1, dx), true_X.reshape(-1, dx), True)
    lE = _ref_ce(masked_pred_E.reshape(-1, de), true_E.reshape(-1, de), True)
    ly = _ref_ce(pred_y.reshape(-1, dy), true_y.reshape(-1, dy), False)
    return lX + lambda_train[0] * lE + lambda_train[1] * ly


if __name__ == "__main__":
    key = jax.random.PRNGKey(0)
    bs, n, dx, de, dy = 2, 16, 8, 5, 4
    lambda_train = (5.0, 0.5)   # deterministic "parameter" of the module

    k = jax.random.split(key, 8)

    # predictions: random logits
    masked_pred_X = jax.random.normal(k[0], (bs, n, dx), jnp.float32)
    masked_pred_E = jax.random.normal(k[1], (bs, n, n, de), jnp.float32)
    pred_y = jax.random.normal(k[2], (bs, dy), jnp.float32)

    # targets: one-hot, with some rows zeroed out (masked nodes / edges)
    x_lbl = jax.random.randint(k[3], (bs, n), 0, dx)
    true_X = jax.nn.one_hot(x_lbl, dx, dtype=jnp.float32)
    node_mask = jax.random.bernoulli(k[4], 0.75, (bs, n)).astype(jnp.float32)
    true_X = true_X * node_mask[..., None]

    e_lbl = jax.random.randint(k[5], (bs, n, n), 0, de)
    true_E = jax.nn.one_hot(e_lbl, de, dtype=jnp.float32)
    edge_mask = jax.random.bernoulli(k[6], 0.6, (bs, n, n)).astype(jnp.float32)
    true_E = true_E * edge_mask[..., None]

    y_lbl = jax.random.randint(k[7], (bs,), 0, dy)
    true_y = jax.nn.one_hot(y_lbl, dy, dtype=jnp.float32)

    ref = jax.block_until_ready(
        _ref_loss(masked_pred_X, masked_pred_E, pred_y,
                  true_X, true_E, true_y, lambda_train))

    # default policy: E (bs*n*n = 512 rows) goes through the Pallas kernel,
    # X (32 rows) and y through the plain-JAX small path.
    loss = jax.block_until_ready(
        train_loss_discrete(masked_pred_X, masked_pred_E, pred_y,
                            true_X, true_E, true_y, lambda_train))
    assert jnp.allclose(loss, ref, rtol=1e-5, atol=1e-5), (loss, ref)

    # force every loss through the Pallas kernel (single full-extent blocks)
    loss_all = jax.block_until_ready(
        train_loss_discrete(masked_pred_X, masked_pred_E, pred_y,
                            true_X, true_E, true_y, lambda_train,
                            min_pallas_rows=0))
    assert jnp.allclose(loss_all, ref, rtol=1e-5, atol=1e-5), (loss_all, ref)

    # multi-block grid + ragged tail + uneven 2-way core split (forces tn=256,
    # N=2700 -> 11 blocks -> splits=2, inner=6, last logical block clamped)
    kk = jax.random.split(jax.random.PRNGKey(1), 3)
    p2 = jax.random.normal(kk[0], (2700, 7), jnp.float32)
    t2 = jax.nn.one_hot(jax.random.randint(kk[1], (2700,), 0, 7), 7,
                        dtype=jnp.float32)
    m2 = jax.random.bernoulli(kk[2], 0.7, (2700,)).astype(jnp.float32)
    t2 = t2 * m2[:, None]
    s2, c2 = _masked_ce_sums(p2, t2, tn=256, min_pallas_rows=0)
    l2 = jax.block_until_ready(s2 / c2)
    ref2 = jax.block_until_ready(_ref_ce(p2, t2, True))
    assert jnp.allclose(l2, ref2, rtol=1e-4, atol=1e-4), (l2, ref2)

    print("KERNEL_OK")
</pallas_src>

<mosaic_0001>
module attributes {stable_mosaic.version = 11 : i64} {
  func.func @_ce_sum_kernel(%arg0: i32, %arg1: i32, %arg2: memref<5x512xf32, #tpu.memory_space<vmem>>, %arg3: memref<1x512xi32, #tpu.memory_space<vmem>>, %arg4: memref<1x128xf32, #tpu.memory_space<vmem>>, %arg5: memref<1x128xf32, #tpu.memory_space<vmem>>) attributes {dimension_semantics = [#tpu.dimension_semantics<parallel>, #tpu.dimension_semantics<arbitrary>], iteration_bounds = array<i64: 1, 1>, scalar_prefetch = 0 : i64, scratch_operands = 0 : i64, tpu.core_type = #tpu.core_type<tc>, window_params = [{transform_indices = @transform_0, window_bounds = array<i64: 5, 512>}, {transform_indices = @transform_1, window_bounds = array<i64: 1, 512>}, {transform_indices = @transform_2, window_bounds = array<i64: 1, 128>}, {transform_indices = @transform_3, window_bounds = array<i64: 1, 128>}]} {
    %c0_i32 = arith.constant 0 : i32
    %0 = arith.cmpi eq, %arg1, %c0_i32 : i32
    %1 = arith.extui %0 : i1 to i32
    %c0_i32_0 = arith.constant 0 : i32
    %2 = arith.cmpi ne, %1, %c0_i32_0 : i32
    scf.if %2 {
      %cst_21 = arith.constant 0.000000e+00 : f32
      %51 = vector.broadcast %cst_21 : f32 to vector<1x128xf32>
      %c0_22 = arith.constant 0 : index
      %c0_23 = arith.constant 0 : index
      %52 = vector.load %arg4[%c0_22, %c0_23] : memref<1x128xf32, #tpu.memory_space<vmem>>, vector<1x128xf32>
      tpu.vector_store %arg4[%c0_22, %c0_23], %51 {strides = array<i32>} : memref<1x128xf32, #tpu.memory_space<vmem>>, vector<1x128xf32>,
      %cst_24 = arith.constant 0.000000e+00 : f32
      %53 = vector.broadcast %cst_24 : f32 to vector<1x128xf32>
      %c0_25 = arith.constant 0 : index
      %c0_26 = arith.constant 0 : index
      %54 = vector.load %arg5[%c0_25, %c0_26] : memref<1x128xf32, #tpu.memory_space<vmem>>, vector<1x128xf32>
      tpu.vector_store %arg5[%c0_25, %c0_26], %53 {strides = array<i32>} : memref<1x128xf32, #tpu.memory_space<vmem>>, vector<1x128xf32>,
    } else {
    }
    %c0 = arith.constant 0 : index
    %c0_1 = arith.constant 0 : index
    %3 = vector.load %arg2[%c0, %c0_1] : memref<5x512xf32, #tpu.memory_space<vmem>>, vector<5x512xf32>
    %c0_2 = arith.constant 0 : index
    %c0_3 = arith.constant 0 : index
    %4 = vector.load %arg3[%c0_2, %c0_3] : memref<1x512xi32, #tpu.memory_space<vmem>>, vector<1x512xi32>
    %c1_i32 = arith.constant 1 : i32
    %5 = arith.muli %arg0, %c1_i32 : i32
    %6 = arith.addi %5, %arg1 : i32
    %c512_i32 = arith.constant 512 : i32
    %7 = arith.muli %6, %c512_i32 : i32
    %8 = tpu.iota {dimensions = array<i32: 1>} : vector<1x512xi32>
    %9 = vector.broadcast %7 : i32 to vector<1x512xi32>
    %10 = arith.addi %9, %8 : vector<1x512xi32>
    %c512_i32_4 = arith.constant 512 : i32
    %11 = vector.broadcast %c512_i32_4 : i32 to vector<1x512xi32>
    %12 = arith.cmpi slt, %10, %11 : vector<1x512xi32>
    %c0_i32_5 = arith.constant 0 : i32
    %13 = vector.broadcast %c0_i32_5 : i32 to vector<1x512xi32>
    %14 = arith.cmpi sge, %4, %13 : vector<1x512xi32>
    %15 = arith.andi %12, %14 : vector<1x512xi1>
    %16 = tpu.iota {dimensions = array<i32: 0>} : vector<5x512xi32>
    %17 = vector.broadcast %4 : vector<1x512xi32> to vector<5x512xi32>
    %18 = arith.cmpi eq, %16, %17 : vector<5x512xi32>
    %19 = arith.extui %18 : vector<5x512xi1> to vector<5x512xi32>
    %20 = arith.sitofp %19 : vector<5x512xi32> to vector<5x512xf32>
    %21 = arith.mulf %3, %20 : vector<5x512xf32>
    %cst = arith.constant dense<0.000000e+00> : vector<512xf32>
    %22 = vector.multi_reduction <add>, %21, %cst [0] : vector<5x512xf32> to vector<512xf32>
    %23 = vector.shape_cast %22 : vector<512xf32> to vector<1x512xf32>
    %cst_6 = arith.constant dense<0xFF800000> : vector<512xf32>
    %24 = vector.multi_reduction <maximumf>, %3, %cst_6 [0] : vector<5x512xf32> to vector<512xf32>
    %25 = vector.shape_cast %24 : vector<512xf32> to vector<1x512xf32>
    %26 = vector.broadcast %25 : vector<1x512xf32> to vector<5x512xf32>
    %27 = arith.subf %3, %26 : vector<5x512xf32>
    %28 = math.exp %27 : vector<5x512xf32>
    %cst_7 = arith.constant dense<0.000000e+00> : vector<512xf32>
    %29 = vector.multi_reduction <add>, %28, %cst_7 [0] : vector<5x512xf32> to vector<512xf32>
    %30 = vector.shape_cast %29 : vector<512xf32> to vector<1x512xf32>
    %31 = math.log %30 : vector<1x512xf32>
    %32 = arith.addf %25, %31 : vector<1x512xf32>
    %33 = arith.subf %32, %23 : vector<1x512xf32>
    %c0_8 = arith.constant 0 : index
    %c0_9 = arith.constant 0 : index
    %34 = vector.load %arg4[%c0_8, %c0_9] : memref<1x128xf32, #tpu.memory_space<vmem>>, vector<1x128xf32>
    %cst_10 = arith.constant 0.000000e+00 : f32
    %35 = vector.broadcast %cst_10 : f32 to vector<1x512xf32>
    %36 = arith.select %15, %33, %35 : vector<1x512xi1>, vector<1x512xf32>
    %cst_11 = arith.constant dense<0.000000e+00> : vector<1xf32>
    %37 = vector.multi_reduction <add>, %36, %cst_11 [1] : vector<1x512xf32> to vector<1xf32>
    %38 = vector.shape_cast %37 : vector<1xf32> to vector<1x1xf32>
    %39 = vector.broadcast %38 : vector<1x1xf32> to vector<1x128xf32>
    %40 = arith.addf %34, %39 : vector<1x128xf32>
    %c0_12 = arith.constant 0 : index
    %c0_13 = arith.constant 0 : index
    %41 = vector.load %arg4[%c0_12, %c0_13] : memref<1x128xf32, #tpu.memory_space<vmem>>, vector<1x128xf32>
    tpu.vector_store %arg4[%c0_12, %c0_13], %40 {strides = array<i32>} : memref<1x128xf32, #tpu.memory_space<vmem>>, vector<1x128xf32>,
    %c0_14 = arith.constant 0 : index
    %c0_15 = arith.constant 0 : index
    %42 = vector.load %arg5[%c0_14, %c0_15] : memref<1x128xf32, #tpu.memory_space<vmem>>, vector<1x128xf32>
    %cst_16 = arith.constant 1.000000e+00 : f32
    %cst_17 = arith.constant 0.000000e+00 : f32
    %43 = vector.broadcast %cst_16 : f32 to vector<1x512xf32>
    %44 = vector.broadcast %cst_17 : f32 to vector<1x512xf32>
    %45 = arith.select %15, %43, %44 : vector<1x512xi1>, vector<1x512xf32>
    %cst_18 = arith.constant dense<0.000000e+00> : vector<1xf32>
    %46 = vector.multi_reduction <add>, %45, %cst_18 [1] : vector<1x512xf32> to vector<1xf32>
    %47 = vector.shape_cast %46 : vector<1xf32> to vector<1x1xf32>
    %48 = vector.broadcast %47 : vector<1x1xf32> to vector<1x128xf32>
    %49 = arith.addf %42, %48 : vector<1x128xf32>
    %c0_19 = arith.constant 0 : index
    %c0_20 = arith.constant 0 : index
    %50 = vector.load %arg5[%c0_19, %c0_20] : memref<1x128xf32, #tpu.memory_space<vmem>>, vector<1x128xf32>
    tpu.vector_store %arg5[%c0_19, %c0_20], %49 {strides = array<i32>} : memref<1x128xf32, #tpu.memory_space<vmem>>, vector<1x128xf32>,
    return
  }
  func.func @transform_0(%arg0: i32, %arg1: i32) -> (i32, i32) {
    %c1_i32 = arith.constant 1 : i32
    %0 = arith.muli %arg0, %c1_i32 : i32
    %1 = arith.addi %0, %arg1 : i32
    %c0_i32 = arith.constant 0 : i32
    %2 = arith.minsi %1, %c0_i32 : i32
    %c0_i32_0 = arith.constant 0 : i32
    %c0_i32_1 = arith.constant 0 : i32
    return %c0_i32_0, %2 : i32, i32
  }
  func.func @transform_1(%arg0: i32, %arg1: i32) -> (i32, i32) {
    %c1_i32 = arith.constant 1 : i32
    %0 = arith.muli %arg0, %c1_i32 : i32
    %1 = arith.addi %0, %arg1 : i32
    %c0_i32 = arith.constant 0 : i32
    %2 = arith.minsi %1, %c0_i32 : i32
    %c0_i32_0 = arith.constant 0 : i32
    %c0_i32_1 = arith.constant 0 : i32
    return %c0_i32_0, %2 : i32, i32
  }
  func.func @transform_2(%arg0: i32, %arg1: i32) -> (i32, i32) {
    %c0_i32 = arith.constant 0 : i32
    %c0_i32_0 = arith.constant 0 : i32
    return %c0_i32, %arg0 : i32, i32
  }
  func.func @transform_3(%arg0: i32, %arg1: i32) -> (i32, i32) {
    %c0_i32 = arith.constant 0 : i32
    %c0_i32_0 = arith.constant 0 : i32
    return %c0_i32, %arg0 : i32, i32
  }
}

</mosaic_0001>

<llo_original>
// kernel: tpu_custom_call.1
$region0: #{tpu_custom_call.1}
  #allocation0 [shape = 'u32[]', space=smem, size = 0x4, offset = 0x4, fixed_abs, tag = 'smem constant byte address 0x4 - core index']
  #allocation1 [shape = 'u32[144,128]{1,0:T(1,128)}', space=vmem, size = 0x12000, scoped, tag = 'internal scratch']
  %s0 = inlined_call_operand.hbm [shape: f32[5,512], index: 0, kind: input, shape index: {}]
  %s1 = inlined_call_operand.hbm [shape: s32[1,512], index: 1, kind: input, shape index: {}]
  %s2 = inlined_call_operand.hbm [shape: f32[1,128], index: 2, kind: output, shape index: {0}]
  %s3 = inlined_call_operand.hbm [shape: f32[1,128], index: 3, kind: output, shape index: {1}]
  %4 = xla_tuple %s2, %s3
  %s5 = sld [smem:[#allocation0]]
  $region38: #{tpu_custom_call.1} parent=0
    _
  %s7 = ssub.s32 1, %s5
  %s8 = scalar_select 0, %s7, %s5
  $region1: #{tpu_custom_call.1} parent=0
    #allocation2 [shape = 'u8[16384]{0}', space=vmem, size = 0x4000, scoped, tag = 'input window, operand 0, single buffered']
    #allocation3 [shape = 's32[1]{0}', space=sflag, size = 0x4, scoped, tag = 'scoped memory for tpu_custom_call.1']
    #allocation4 [shape = 's32[1]{0}', space=sflag, size = 0x4, scoped, tag = 'scoped memory for tpu_custom_call.1']
    #allocation5 [shape = 'u8[2048]{0}', space=vmem, size = 0x800, scoped, tag = 'input window, operand 1, single buffered']
    #allocation6 [shape = 's32[1]{0}', space=sflag, size = 0x4, scoped, tag = 'scoped memory for tpu_custom_call.1']
    #allocation7 [shape = 'u8[512]{0}', space=vmem, size = 0x400, scoped, tag = 'output window, operand 0, single buffered']
    #allocation8 [shape = 'u8[512]{0}', space=vmem, size = 0x400, scoped, tag = 'output window, operand 1, single buffered']
    #allocation9 [shape = 's32[1]{0}', space=sflag, size = 0x4, scoped, tag = 'scoped memory for tpu_custom_call.1']
    %9 = vsyncpa [#allocation3], 0
    %10 = vsyncpa [#allocation6], 0
    %11 = vsyncpa [#allocation4], 0
    %12 = vsyncpa [#allocation9], 0
    // Predicated region
    $region2: #{tpu_custom_call.1} parent=1 // pred_check
      _
    $region3: #{tpu_custom_call.1} parent=1 // pred_check_branch
      %14 = sbr.rel (0) target = $region5
    $region4: #{tpu_custom_call.1} parent=1 // pred_region
      %s15 = sadd.s32 0, 0
      %p16 = scmp.lt.s32.totalorder %s15, 0
      %s17 = scalar_select %p16, %s15, 0
      %s18 = smul.u32 4, %s17
      %s20 = ssub.s32 512, 512
      %21 = vsyncadd [#allocation3], %s20
      %s22 = smul.addr %s18, 128
      %s23 = scalar_lea.hbm %s0, %s22
      %s25 = sshll.u32 [#allocation2], 4
      %s26 = int_to_ptr.vmem [resolvable:$true] %s25
      %28 = dma.hbm_to_vmem [thread:$0]  %s23, 512, %s26, [#allocation3]
    $region5: #{tpu_custom_call.1} parent=1 // pred_fallthru
      _
    // Predicated region
    $region6: #{tpu_custom_call.1} parent=1 // pred_check
      _
    $region7: #{tpu_custom_call.1} parent=1 // pred_check_branch
      %30 = sbr.rel (0) target = $region9
    $region8: #{tpu_custom_call.1} parent=1 // pred_region
      %s31 = sadd.s32 0, 0
      %p32 = scmp.lt.s32.totalorder %s31, 0
      %s33 = scalar_select %p32, %s31, 0
      %s34 = smul.u32 4, %s33
      %s36 = ssub.s32 64, 64
      %37 = vsyncadd [#allocation6], %s36
      %s38 = smul.addr %s34, 16
      %s39 = scalar_lea.hbm %s1, %s38
      %s41 = sshll.u32 [#allocation5], 4
      %s42 = int_to_ptr.vmem [resolvable:$true] %s41
      %44 = dma.hbm_to_vmem [thread:$0]  %s39, 64, %s42, [#allocation6]
    $region9: #{tpu_custom_call.1} parent=1 // pred_fallthru
      _
    // Predicated region
    $region10: #{tpu_custom_call.1} parent=1 // pred_check
      _
    $region11: #{tpu_custom_call.1} parent=1 // pred_check_branch
      %46 = sbr.rel (0) target = $region13
    $region12: #{tpu_custom_call.1} parent=1 // pred_region
      %47 = dma.done [#allocation3], 512
    $region13: #{tpu_custom_call.1} parent=1 // pred_fallthru
      _
    // Predicated region
    $region14: #{tpu_custom_call.1} parent=1 // pred_check
      _
    $region15: #{tpu_custom_call.1} parent=1 // pred_check_branch
      %49 = sbr.rel (0) target = $region17
    $region16: #{tpu_custom_call.1} parent=1 // pred_region
      %50 = dma.done [#allocation6], 64
    $region17: #{tpu_custom_call.1} parent=1 // pred_fallthru
      _
    %s51 = sadd.s32 0, 0
    %p52 = scmp.lt.s32.totalorder %s51, 0
    %s53 = scalar_select %p52, %s51, 0
    %s54 = smul.u32 4, %s53
    %s55 = sadd.s32 0, 0
    %p56 = scmp.lt.s32.totalorder %s55, 0
    %s57 = scalar_select %p56, %s55, 0
    %s58 = smul.u32 4, %s57
    %p59 = scmp.eq.s32.totalorder 0, 0
    // Predicated region
    $region18: #{tpu_custom_call.1} parent=1 // pred_check
      %p60 = pneg %p59
    $region19: #{tpu_custom_call.1} parent=1 // pred_check_branch
      %62 = sbr.rel (%p60) target = $region21
    $region20: #{tpu_custom_call.1} parent=1 // pred_region
      %63 = vst [vmem:[#allocation7] sm:$0x1] 0.0
      %64 = vst [vmem:[#allocation8] sm:$0x1] 0.0
    $region21: #{tpu_custom_call.1} parent=1 // pred_fallthru
      _
    %v65 = vld [vmem:[#allocation2] sm:$0x1f]
    %v66 = vld [vmem:[#allocation2 + $0x8] sm:$0x1f]
    %v67 = vld [vmem:[#allocation2 + $0x10] sm:$0x1f]
    %v68 = vld [vmem:[#allocation2 + $0x18] sm:$0x1f]
    %v69 = vld [vmem:[#allocation5] sm:$0xf]
    %s70 = sadd.s32 0, 0
    %s71 = smul.u32 %s70, 512
    %v72 = vlaneseq
    %v73 = vand.u32 %v72, 127
    %v74 = vadd.s32 %v73, 128
    %v75 = vadd.s32 %v73, 256
    %v76 = vadd.s32 %v73, 384
    %v77 = vstv %s71
    %v78 = vadd.s32 %v77, %v73
    %v79 = vadd.s32 %v77, %v74
    %v80 = vadd.s32 %v77, %v75
    %v81 = vadd.s32 %v77, %v76
    %vm82 = vcmp.lt.s32.totalorder %v78, 512
    %vm83 = vcmp.lt.s32.totalorder %v79, 512
    %vm84 = vcmp.lt.s32.totalorder %v80, 512
    %vm85 = vcmp.lt.s32.totalorder %v81, 512
    %vm86 = vcmp.ge.s32.totalorder %v69, 0
    %v87 = vsel %vm86, 1, 0
    %v88 = vlaneseq
    %v89 = vshrl.u32 %v88, 7
    %v90 = vsub.s32 0, %v89
    %v91 = vrot.slane %v87, %v90
    %v92 = vlaneseq
    %v93 = vshrl.u32 %v92, 7
    %v94 = vsub.s32 1, %v93
    %v95 = vrot.slane %v87, %v94
    %v96 = vlaneseq
    %v97 = vshrl.u32 %v96, 7
    %v98 = vsub.s32 2, %v97
    %v99 = vrot.slane %v87, %v98
    %v100 = vlaneseq
    %v101 = vshrl.u32 %v100, 7
    %v102 = vsub.s32 3, %v101
    %v103 = vrot.slane %v87, %v102
    %vm104 = vcmp.ne.s32.totalorder %v91, 0
    %vm105 = vcmp.ne.s32.totalorder %v95, 0
    %vm106 = vcmp.ne.s32.totalorder %v99, 0
    %vm107 = vcmp.ne.s32.totalorder %v103, 0
    %vm108 = vmand %vm82, %vm104
    %vm109 = vmand %vm83, %vm105
    %vm110 = vmand %vm84, %vm106
    %vm111 = vmand %vm85, %vm107
    %v112 = vlaneseq
    %v113 = vshrl.u32 %v112, 7
    %v114 = vlaneseq
    %v115 = vshrl.u32 %v114, 7
    %v116 = vsub.s32 0, %v115
    %v117 = vrot.slane %v69, %v116
    %v118 = vlaneseq
    %v119 = vshrl.u32 %v118, 7
    %v120 = vsub.s32 1, %v119
    %v121 = vrot.slane %v69, %v120
    %v122 = vlaneseq
    %v123 = vshrl.u32 %v122, 7
    %v124 = vsub.s32 2, %v123
    %v125 = vrot.slane %v69, %v124
    %v126 = vlaneseq
    %v127 = vshrl.u32 %v126, 7
    %v128 = vsub.s32 3, %v127
    %v129 = vrot.slane %v69, %v128
    %vm130 = vcmp.eq.s32.totalorder %v113, %v117
    %vm131 = vcmp.eq.s32.totalorder %v113, %v121
    %vm132 = vcmp.eq.s32.totalorder %v113, %v125
    %vm133 = vcmp.eq.s32.totalorder %v113, %v129
    %v134 = vsel %vm130, 1, 0
    %v135 = vsel %vm131, 1, 0
    %v136 = vsel %vm132, 1, 0
    %v137 = vsel %vm133, 1, 0
    %v138 = vcvt.s32.f32 %v134
    %v139 = vcvt.s32.f32 %v135
    %v140 = vcvt.s32.f32 %v136
    %v141 = vcvt.s32.f32 %v137
    %v142 = vmul.f32 %v65, %v138
    %v143 = vmul.f32 %v66, %v139
    %v144 = vmul.f32 %v67, %v140
    %v145 = vmul.f32 %v68, %v141
    %vm146 = vcmask 1044480
    %v147 = vsel %vm146, %v142, 0.0
    %v148 = vrot.slane %v147, 4
    %v149 = vadd.f32 %v147, %v148
    %v150 = vrot.slane %v149, 2
    %v151 = vadd.f32 %v149, %v150
    %v152 = vrot.slane %v151, 1
    %v153 = vadd.f32 %v151, %v152
    %v154 = vsel %vm146, %v143, 0.0
    %v155 = vrot.slane %v154, 4
    %v156 = vadd.f32 %v154, %v155
    %v157 = vrot.slane %v156, 2
    %v158 = vadd.f32 %v156, %v157
    %v159 = vrot.slane %v158, 1
    %v160 = vadd.f32 %v158, %v159
    %v161 = vsel %vm146, %v144, 0.0
    %v162 = vrot.slane %v161, 4
    %v163 = vadd.f32 %v161, %v162
    %v164 = vrot.slane %v163, 2
    %v165 = vadd.f32 %v163, %v164
    %v166 = vrot.slane %v165, 1
    %v167 = vadd.f32 %v165, %v166
    %v168 = vsel %vm146, %v145, 0.0
    %v169 = vrot.slane %v168, 4
    %v170 = vadd.f32 %v168, %v169
    %v171 = vrot.slane %v170, 2
    %v172 = vadd.f32 %v170, %v171
    %v173 = vrot.slane %v172, 1
    %v174 = vadd.f32 %v172, %v173
    %v175 = vsel %vm146, %v65, -inf
    %v176 = vrot.slane %v175, 4
    %v177 = vmax.f32 %v175, %v176
    %v178 = vrot.slane %v177, 2
    %v179 = vmax.f32 %v177, %v178
    %v180 = vrot.slane %v179, 1
    %v181 = vmax.f32 %v179, %v180
    %v182 = vsel %vm146, %v66, -inf
    %v183 = vrot.slane %v182, 4
    %v184 = vmax.f32 %v182, %v183
    %v185 = vrot.slane %v184, 2
    %v186 = vmax.f32 %v184, %v185
    %v187 = vrot.slane %v186, 1
    %v188 = vmax.f32 %v186, %v187
    %v189 = vsel %vm146, %v67, -inf
    %v190 = vrot.slane %v189, 4
    %v191 = vmax.f32 %v189, %v190
    %v192 = vrot.slane %v191, 2
    %v193 = vmax.f32 %v191, %v192
    %v194 = vrot.slane %v193, 1
    %v195 = vmax.f32 %v193, %v194
    %v196 = vsel %vm146, %v68, -inf
    %v197 = vrot.slane %v196, 4
    %v198 = vmax.f32 %v196, %v197
    %v199 = vrot.slane %v198, 2
    %v200 = vmax.f32 %v198, %v199
    %v201 = vrot.slane %v200, 1
    %v202 = vmax.f32 %v200, %v201
    %v203 = vsub.f32 %v65, %v181
    %v204 = vsub.f32 %v66, %v188
    %v205 = vsub.f32 %v67, %v195
    %v206 = vsub.f32 %v68, %v202
    %v207 = vmul.f32 %v203, 1.442695
    %v208 = vpow.pop %v207
    %v209 = vmul.f32 %v204, 1.442695
    %v210 = vpow.pop %v209
    %v211 = vmul.f32 %v205, 1.442695
    %v212 = vpow.pop %v211
    %v213 = vmul.f32 %v206, 1.442695
    %v214 = vpow.pop %v213
    %v215 = vsel %vm146, %v208, 0.0
    %v216 = vrot.slane %v215, 4
    %v217 = vadd.f32 %v215, %v216
    %v218 = vrot.slane %v217, 2
    %v219 = vadd.f32 %v217, %v218
    %v220 = vrot.slane %v219, 1
    %v221 = vadd.f32 %v219, %v220
    %v222 = vsel %vm146, %v210, 0.0
    %v223 = vrot.slane %v222, 4
    %v224 = vadd.f32 %v222, %v223
    %v225 = vrot.slane %v224, 2
    %v226 = vadd.f32 %v224, %v225
    %v227 = vrot.slane %v226, 1
    %v228 = vadd.f32 %v226, %v227
    %v229 = vsel %vm146, %v212, 0.0
    %v230 = vrot.slane %v229, 4
    %v231 = vadd.f32 %v229, %v230
    %v232 = vrot.slane %v231, 2
    %v233 = vadd.f32 %v231, %v232
    %v234 = vrot.slane %v233, 1
    %v235 = vadd.f32 %v233, %v234
    %v236 = vsel %vm146, %v214, 0.0
    %v237 = vrot.slane %v236, 4
    %v238 = vadd.f32 %v236, %v237
    %v239 = vrot.slane %v238, 2
    %v240 = vadd.f32 %v238, %v239
    %v241 = vrot.slane %v240, 1
    %v242 = vadd.f32 %v240, %v241
    %v243 = vlog2.pop %v221
    %v244 = vmul.f32 %v243, 0.6931472
    %v245 = vlog2.pop %v228
    %v246 = vmul.f32 %v245, 0.6931472
    %v247 = vlog2.pop %v235
    %v248 = vmul.f32 %v247, 0.6931472
    %v249 = vlog2.pop %v242
    %v250 = vmul.f32 %v249, 0.6931472
    %v251 = vadd.f32 %v181, %v244
    %v252 = vadd.f32 %v188, %v246
    %v253 = vadd.f32 %v195, %v248
    %v254 = vadd.f32 %v202, %v250
    %v255 = vsub.f32 %v251, %v153
    %v256 = vsub.f32 %v252, %v160
    %v257 = vsub.f32 %v253, %v167
    %v258 = vsub.f32 %v254, %v174
    %v259 = vld [vmem:[#allocation7] sm:$0x1]
    %v260 = vsel %vm108, %v255, 0.0
    %v261 = vsel %vm109, %v256, 0.0
    %v262 = vsel %vm110, %v257, 0.0
    %v263 = vsel %vm111, %v258, 0.0
    %vm264 = vcmask 1040384
    %v265 = vsel %vm264, %v260, 0.0
    %v266 = vsel %vm264, %v261, 0.0
    %v267 = vadd.f32 %v265, %v266
    %v268 = vsel %vm264, %v262, 0.0
    %v269 = vadd.f32 %v267, %v268
    %v270 = vsel %vm264, %v263, 0.0
    %v271 = vadd.f32 %v269, %v270
    %272 = vadd.xlane.f32.xlu0 %v271
    %v273 = vpop.xlane.xlu0 %272
    %v274 = vadd.f32 %v259, %v273
    %275 = vst [vmem:[#allocation7] sm:$0x1] %v274
    %v276 = vld [vmem:[#allocation8] sm:$0x1]
    %v277 = vsel %vm108, 1.0, 0.0
    %v278 = vsel %vm109, 1.0, 0.0
    %v279 = vsel %vm110, 1.0, 0.0
    %v280 = vsel %vm111, 1.0, 0.0
    %v281 = vsel %vm264, %v277, 0.0
    %v282 = vsel %vm264, %v278, 0.0
    %v283 = vadd.f32 %v281, %v282
    %v284 = vsel %vm264, %v279, 0.0
    %v285 = vadd.f32 %v283, %v284
    %v286 = vsel %vm264, %v280, 0.0
    %v287 = vadd.f32 %v285, %v286
    %288 = vadd.xlane.f32.xlu0 %v287
    %v289 = vpop.xlane.xlu0 %288
    %v290 = vadd.f32 %v276, %v289
    %291 = vst [vmem:[#allocation8] sm:$0x1] %v290
    // Predicated region
    $region22: #{tpu_custom_call.1} parent=1 // pred_check
      _
    $region23: #{tpu_custom_call.1} parent=1 // pred_check_branch
      %293 = sbr.rel (0) target = $region25
    $region24: #{tpu_custom_call.1} parent=1 // pred_region
      %s295 = ssub.s32 16, 16
      %296 = vsyncadd [#allocation4], %s295
      %s298 = sshll.u32 [#allocation7], 4
      %s299 = int_to_ptr.vmem [resolvable:$true] %s298
      %301 = dma.vmem_to_hbm [thread:$0]  %s299, 16, %s2, [#allocation4]
    $region25: #{tpu_custom_call.1} parent=1 // pred_fallthru
      _
    // Predicated region
    $region26: #{tpu_custom_call.1} parent=1 // pred_check
      _
    $region27: #{tpu_custom_call.1} parent=1 // pred_check_branch
      %303 = sbr.rel (0) target = $region29
    $region28: #{tpu_custom_call.1} parent=1 // pred_region
      %s305 = ssub.s32 16, 16
      %306 = vsyncadd [#allocation9], %s305
      %s308 = sshll.u32 [#allocation8], 4
      %s309 = int_to_ptr.vmem [resolvable:$true] %s308
      %311 = dma.vmem_to_hbm [thread:$0]  %s309, 16, %s3, [#allocation9]
    $region29: #{tpu_custom_call.1} parent=1 // pred_fallthru
      _
    // Predicated region
    $region30: #{tpu_custom_call.1} parent=1 // pred_check
      _
    $region31: #{tpu_custom_call.1} parent=1 // pred_check_branch
      %313 = sbr.rel (0) target = $region33
    $region32: #{tpu_custom_call.1} parent=1 // pred_region
      %314 = dma.done [#allocation4], 16
    $region33: #{tpu_custom_call.1} parent=1 // pred_fallthru
      _
    // Predicated region
    $region34: #{tpu_custom_call.1} parent=1 // pred_check
      _
    $region35: #{tpu_custom_call.1} parent=1 // pred_check_branch
      %316 = sbr.rel (0) target = $region37
    $region36: #{tpu_custom_call.1} parent=1 // pred_region
      %317 = dma.done [#allocation9], 16
    $region37: #{tpu_custom_call.1} parent=1 // pred_fallthru
      _
    %318 = vsyncpa [#allocation3], 1
    %319 = vsyncpa [#allocation6], 1
    %320 = vsyncpa [#allocation4], 1
    %321 = vsyncpa [#allocation9], 1

</llo_original>
